<compile_context>
chip_gen: v5e
topology: v5e:2x2
jax: 0.10.0
libtpu: 0.0.40
codegen_flags: <defaults>
</compile_context>

<pallas_src>
import jax
import jax.numpy as jnp
from jax.experimental import pallas as pl
from jax.experimental.pallas import tpu as pltpu


def add_kernel(x_ref, y_ref, o_ref):
    # Elementwise add on the current VMEM tile (VPU path).
    o_ref[...] = x_ref[...] + y_ref[...]


def pallas_add(x, y, *, lane_width=1024, target_tile_rows=512):
    """Elementwise add of two same-shape, same-dtype arrays via Pallas."""
    assert x.shape == y.shape, "broadcasting not needed for this module's test"
    assert x.dtype == y.dtype
    assert lane_width % 128 == 0, "lane width must be a multiple of 128"

    orig_shape = x.shape
    dtype = x.dtype
    itemsize = jnp.dtype(dtype).itemsize
    total = 1
    for d in orig_shape:
        total *= int(d)

    # ---- Lane-dense 2D layout: (rows, lane_width), pad tail if needed ----
    N = lane_width
    padded_total = ((total + N - 1) // N) * N
    pad = padded_total - total

    xf = x.reshape(-1)
    yf = y.reshape(-1)
    if pad:
        xf = jnp.pad(xf, (0, pad))
        yf = jnp.pad(yf, (0, pad))

    M = padded_total // N
    x2 = xf.reshape(M, N)
    y2 = yf.reshape(M, N)

    # ---- Row tile: full extent if small, else a sublane-packed multiple ----
    # Sublane packing: 8 rows for 32-bit, 16 for 16-bit, 32 for 8-bit dtypes.
    sublane_pack = max(1, 32 // (itemsize * 8)) * 8  # 8 (f32), 16 (bf16), 32 (i8)
    if M <= target_tile_rows:
        bm = M  # full extent is always a legal block size
    else:
        bm = max(sublane_pack, (target_tile_rows // sublane_pack) * sublane_pack)

    grid = (pl.cdiv(M, bm),)

    cost = pl.CostEstimate(
        flops=total,
        transcendentals=0,
        bytes_accessed=3 * total * itemsize,
    )

    out2 = pl.pallas_call(
        add_kernel,
        out_shape=jax.ShapeDtypeStruct((M, N), dtype),
        grid_spec=pl.GridSpec(
            grid=grid,
            in_specs=[
                pl.BlockSpec((bm, N), lambda i: (i, 0)),
                pl.BlockSpec((bm, N), lambda i: (i, 0)),
            ],
            out_specs=pl.BlockSpec((bm, N), lambda i: (i, 0)),
        ),
        compiler_params=pltpu.CompilerParams(
            dimension_semantics=("parallel",),
            # ~12 MiB double-buffered working set + headroom; safely under
            # v7x's 64 MiB physical VMEM and v5e/v6e's 128 MiB.
            vmem_limit_bytes=32 * 1024 * 1024,
        ),
        cost_estimate=cost,
    )(x2, y2)

    out_flat = out2.reshape(-1)
    if pad:
        out_flat = out_flat[:total]
    return out_flat.reshape(orig_shape)


if __name__ == "__main__":
    key = jax.random.PRNGKey(0)
    kx, ky = jax.random.split(key)

    # Small shapes consistent with an elementwise add: (batch=2, ch=4, 16, 16)
    x = jax.random.normal(kx, (2, 4, 16, 16), dtype=jnp.float32)
    y = jax.random.normal(ky, (2, 4, 16, 16), dtype=jnp.float32)

    out = pallas_add(x, y)
    jax.block_until_ready(out)

    # Correctness check against plain JAX reference.
    ref = x + y
    assert out.shape == ref.shape
    assert jnp.allclose(out, ref, atol=1e-6), "mismatch vs reference add"

    print("KERNEL_OK")
</pallas_src>

<mosaic_0001>
module attributes {stable_mosaic.version = 11 : i64} {
  func.func @add_kernel(%arg0: i32, %arg1: memref<2x1024xf32, #tpu.memory_space<vmem>>, %arg2: memref<2x1024xf32, #tpu.memory_space<vmem>>, %arg3: memref<2x1024xf32, #tpu.memory_space<vmem>>) attributes {dimension_semantics = [#tpu.dimension_semantics<parallel>], iteration_bounds = array<i64: 1>, scalar_prefetch = 0 : i64, scratch_operands = 0 : i64, tpu.core_type = #tpu.core_type<tc>, window_params = [{transform_indices = @transform_0, window_bounds = array<i64: 2, 1024>}, {transform_indices = @transform_1, window_bounds = array<i64: 2, 1024>}, {transform_indices = @transform_2, window_bounds = array<i64: 2, 1024>}]} {
    %c0 = arith.constant 0 : index
    %c0_0 = arith.constant 0 : index
    %0 = vector.load %arg1[%c0, %c0_0] : memref<2x1024xf32, #tpu.memory_space<vmem>>, vector<2x1024xf32>
    %c0_1 = arith.constant 0 : index
    %c0_2 = arith.constant 0 : index
    %1 = vector.load %arg2[%c0_1, %c0_2] : memref<2x1024xf32, #tpu.memory_space<vmem>>, vector<2x1024xf32>
    %2 = arith.addf %0, %1 : vector<2x1024xf32>
    %c0_3 = arith.constant 0 : index
    %c0_4 = arith.constant 0 : index
    %3 = vector.load %arg3[%c0_3, %c0_4] : memref<2x1024xf32, #tpu.memory_space<vmem>>, vector<2x1024xf32>
    tpu.vector_store %arg3[%c0_3, %c0_4], %2 {strides = array<i32>} : memref<2x1024xf32, #tpu.memory_space<vmem>>, vector<2x1024xf32>,
    return
  }
  func.func @transform_0(%arg0: i32) -> (i32, i32) {
    %c0_i32 = arith.constant 0 : i32
    %c0_i32_0 = arith.constant 0 : i32
    return %arg0, %c0_i32 : i32, i32
  }
  func.func @transform_1(%arg0: i32) -> (i32, i32) {
    %c0_i32 = arith.constant 0 : i32
    %c0_i32_0 = arith.constant 0 : i32
    return %arg0, %c0_i32 : i32, i32
  }
  func.func @transform_2(%arg0: i32) -> (i32, i32) {
    %c0_i32 = arith.constant 0 : i32
    %c0_i32_0 = arith.constant 0 : i32
    return %arg0, %c0_i32 : i32, i32
  }
}

</mosaic_0001>

<llo_original>
// kernel: tpu_custom_call.1
$region0: #{tpu_custom_call.1}
  #allocation0 [shape = 'u32[]', space=smem, size = 0x4, offset = 0x4, fixed_abs, tag = 'smem constant byte address 0x4 - core index']
  #allocation1 [shape = 'u32[72,128]{1,0:T(1,128)}', space=vmem, size = 0x9000, scoped, tag = 'internal scratch']
  %s0 = inlined_call_operand.hbm [shape: f32[2,1024], index: 0, kind: input, shape index: {}]
  %s1 = inlined_call_operand.hbm [shape: f32[2,1024], index: 1, kind: input, shape index: {}]
  %s2 = inlined_call_operand.hbm [shape: f32[2,1024], index: 2, kind: output, shape index: {}]
  %s3 = sld [smem:[#allocation0]]
  $region26: #{tpu_custom_call.1} parent=0
    _
  %s5 = ssub.s32 1, %s3
  %s6 = scalar_select 0, %s5, %s3
  $region1: #{tpu_custom_call.1} parent=0
    #allocation2 [shape = 'u8[8192]{0}', space=vmem, size = 0x2000, scoped, tag = 'input window, operand 0, single buffered']
    #allocation3 [shape = 's32[1]{0}', space=sflag, size = 0x4, scoped, tag = 'scoped memory for tpu_custom_call.1']
    #allocation4 [shape = 's32[1]{0}', space=sflag, size = 0x4, scoped, tag = 'scoped memory for tpu_custom_call.1']
    #allocation5 [shape = 'u8[8192]{0}', space=vmem, size = 0x2000, scoped, tag = 'input window, operand 1, single buffered']
    #allocation6 [shape = 's32[1]{0}', space=sflag, size = 0x4, scoped, tag = 'scoped memory for tpu_custom_call.1']
    #allocation7 [shape = 'u8[8192]{0}', space=vmem, size = 0x2000, scoped, tag = 'output window, operand 0, single buffered']
    %7 = vsyncpa [#allocation3], 0
    %8 = vsyncpa [#allocation6], 0
    %9 = vsyncpa [#allocation4], 0
    // Predicated region
    $region2: #{tpu_custom_call.1} parent=1 // pred_check
      _
    $region3: #{tpu_custom_call.1} parent=1 // pred_check_branch
      %11 = sbr.rel (0) target = $region5
    $region4: #{tpu_custom_call.1} parent=1 // pred_region
      %13 = vsyncadd [#allocation3], 0
      %s15 = sshll.u32 %s0, 4
      %s16 = int_to_ptr.hbm [resolvable:$true] %s15
      %s17 = sshll.u32 [#allocation2], 4
      %s18 = int_to_ptr.vmem [resolvable:$true] %s17
      %20 = dma.hbm_to_vmem [thread:$0]  %s16, 256, %s18, [#allocation3]
    $region5: #{tpu_custom_call.1} parent=1 // pred_fallthru
      _
    // Predicated region
    $region6: #{tpu_custom_call.1} parent=1 // pred_check
      _
    $region7: #{tpu_custom_call.1} parent=1 // pred_check_branch
      %22 = sbr.rel (0) target = $region9
    $region8: #{tpu_custom_call.1} parent=1 // pred_region
      %24 = vsyncadd [#allocation6], 0
      %s26 = sshll.u32 %s1, 4
      %s27 = int_to_ptr.hbm [resolvable:$true] %s26
      %s28 = sshll.u32 [#allocation5], 4
      %s29 = int_to_ptr.vmem [resolvable:$true] %s28
      %31 = dma.hbm_to_vmem [thread:$0]  %s27, 256, %s29, [#allocation6]
    $region9: #{tpu_custom_call.1} parent=1 // pred_fallthru
      _
    // Predicated region
    $region10: #{tpu_custom_call.1} parent=1 // pred_check
      _
    $region11: #{tpu_custom_call.1} parent=1 // pred_check_branch
      %33 = sbr.rel (0) target = $region13
    $region12: #{tpu_custom_call.1} parent=1 // pred_region
      %35 = dma.done [#allocation3], 256
    $region13: #{tpu_custom_call.1} parent=1 // pred_fallthru
      _
    // Predicated region
    $region14: #{tpu_custom_call.1} parent=1 // pred_check
      _
    $region15: #{tpu_custom_call.1} parent=1 // pred_check_branch
      %37 = sbr.rel (0) target = $region17
    $region16: #{tpu_custom_call.1} parent=1 // pred_region
      %39 = dma.done [#allocation6], 256
    $region17: #{tpu_custom_call.1} parent=1 // pred_fallthru
      _
    %v40 = vld [vmem:[#allocation2] sm:$0xff]
    %v41 = vld [vmem:[#allocation2 + $0x8] sm:$0xff]
    %v42 = vld [vmem:[#allocation5] sm:$0xff]
    %v43 = vld [vmem:[#allocation5 + $0x8] sm:$0xff]
    %v44 = vadd.f32 %v40, %v42
    %v45 = vadd.f32 %v41, %v43
    %46 = vst [vmem:[#allocation7] sm:$0xff] %v44
    %47 = vst [vmem:[#allocation7 + $0x8] sm:$0xff] %v45
    // Predicated region
    $region18: #{tpu_custom_call.1} parent=1 // pred_check
      _
    $region19: #{tpu_custom_call.1} parent=1 // pred_check_branch
      %49 = sbr.rel (0) target = $region21
    $region20: #{tpu_custom_call.1} parent=1 // pred_region
      %51 = vsyncadd [#allocation4], 0
      %s53 = sshll.u32 [#allocation7], 4
      %s54 = int_to_ptr.vmem [resolvable:$true] %s53
      %s55 = sshll.u32 %s2, 4
      %s56 = int_to_ptr.hbm [resolvable:$true] %s55
      %58 = dma.vmem_to_hbm [thread:$0]  %s54, 256, %s56, [#allocation4]
    $region21: #{tpu_custom_call.1} parent=1 // pred_fallthru
      _
    // Predicated region
    $region22: #{tpu_custom_call.1} parent=1 // pred_check
      _
    $region23: #{tpu_custom_call.1} parent=1 // pred_check_branch
      %60 = sbr.rel (0) target = $region25
    $region24: #{tpu_custom_call.1} parent=1 // pred_region
      %62 = dma.done [#allocation4], 256
    $region25: #{tpu_custom_call.1} parent=1 // pred_fallthru
      _
    %63 = vsyncpa [#allocation3], 1
    %64 = vsyncpa [#allocation6], 1
    %65 = vsyncpa [#allocation4], 1

</llo_original>
